<compile_context>
chip_gen: v6e
topology: v6e:2x2x1
jax: 0.10.0
libtpu: 0.0.40
codegen_flags: <defaults>
</compile_context>

<pallas_src>
import functools

import jax
import jax.numpy as jnp
from jax.experimental import pallas as pl
from jax.experimental.pallas import tpu as pltpu


def _round_up(x: int, m: int) -> int:
    return (x + m - 1) // m * m


def _n_transe_kernel(e1_ref, r_ref, e2_ref, out_ref, *, p):
    # Blocks are (TB, D).  DMA moved the stored dtype; compute in f32 (correct
    # split on all of v5e/v6e/v7x: v5e's VPU/EUP have no bf16 path anyway).
    d = (e1_ref[...].astype(jnp.float32)
         + r_ref[...].astype(jnp.float32)
         - e2_ref[...].astype(jnp.float32))                 # (TB, D)  VPU
    if p == 2:
        s = jnp.sum(d * d, axis=-1, keepdims=True)          # (TB, 1)  XLU reduce
        pred = -jnp.sqrt(s)                                  # EUP (own VLIW slot)
    elif p == 1:
        pred = -jnp.sum(jnp.abs(d), axis=-1, keepdims=True)
    else:
        # Generic float p (matches torch.norm(p=...)); not exercised below.
        s = jnp.sum(jnp.abs(d) ** p, axis=-1, keepdims=True)
        pred = -(s ** (1.0 / p))
    out_ref[...] = pred                                      # (TB, 1) f32


def n_transe_forward(e1, r, e2, *, p=2, block_rows=512):
    """Pallas implementation of N_TransE.forward: -||e1 + r - e2||_p over dim 1."""
    assert e1.shape == r.shape == e2.shape and e1.ndim == 2, (e1.shape, r.shape, e2.shape)
    B, D = e1.shape

    # TB triples per grid step; TB is a multiple of 128 so blocks are full
    # (8,128)-tile aligned and the per-step overhead is amortized over TB rows.
    TB = min(block_rows, _round_up(B, 128))

    # VMEM budgeting: 3 inputs x 2 pipeline buffers x TB x D x 4 B must leave
    # headroom under the 32 MiB default scoped limit (v7x: 64 MiB physical).
    vmem_budget = 16 * 1024 * 1024
    while TB > 128 and 3 * 2 * TB * D * 4 > vmem_budget:
        TB //= 2

    # Pad the batch with zero rows (they score 0 and are sliced off below).
    B_pad = _round_up(B, TB)
    if B_pad != B:
        padding = ((0, B_pad - B), (0, 0))
        e1 = jnp.pad(e1, padding)
        r = jnp.pad(r, padding)
        e2 = jnp.pad(e2, padding)

    grid = (B_pad // TB,)
    kernel = functools.partial(_n_transe_kernel, p=p)

    out = pl.pallas_call(
        kernel,
        out_shape=jax.ShapeDtypeStruct((B_pad, 1), jnp.float32),
        grid_spec=pltpu.PrefetchScalarGridSpec(
            num_scalar_prefetch=0,
            grid=grid,
            in_specs=[
                pl.BlockSpec((TB, D), lambda i: (i, 0)),
                pl.BlockSpec((TB, D), lambda i: (i, 0)),
                pl.BlockSpec((TB, D), lambda i: (i, 0)),
            ],
            out_specs=pl.BlockSpec((TB, 1), lambda i: (i, 0)),
        ),
        compiler_params=pltpu.CompilerParams(
            # Each output block is independent -> grid steps may be sharded
            # across both TensorCores on v7x; neutral on v5e/v6e.
            dimension_semantics=("parallel",),
        ),
    )(e1, r, e2)

    return out.reshape(B_pad)[:B]


def decoder_transe_forward(ins_emb, rel_emb, sample, *, p=2):
    """Decoder('transe')-style convenience wrapper (previous interface).

    The row gather is plain XLA glue (the N_TransE module itself receives
    already-gathered e1/r/e2); no full-table dtype cast is performed.
    """
    sample = sample.astype(jnp.int32)
    e1 = jnp.take(ins_emb, sample[:, 0], axis=0)
    r = jnp.take(rel_emb, sample[:, 1], axis=0)
    e2 = jnp.take(ins_emb, sample[:, 2], axis=0)
    # TODO(synk): fuse this gather into the kernel with manual, double-buffered
    # pltpu.make_async_copy row copies and a flattened [3*B] int32 scalar-
    # prefetch index table if the gather itself ever becomes the bottleneck.
    return n_transe_forward(e1, r, e2, p=p)


if __name__ == "__main__":
    key = jax.random.PRNGKey(0)
    k1, k2, k3, k4, k5, kh, kr, kt = jax.random.split(key, 8)

    # Shapes consistent with the module: a batch of triples of D-dim embeddings.
    B, D = 8, 128
    e1 = jax.random.normal(k1, (B, D), dtype=jnp.float32)
    r = jax.random.normal(k2, (B, D), dtype=jnp.float32)
    e2 = jax.random.normal(k3, (B, D), dtype=jnp.float32)

    # p = 2 (train_dist='euclidean').
    pred = jax.block_until_ready(n_transe_forward(e1, r, e2, p=2))
    ref = -jnp.linalg.norm(e1 + r - e2, axis=1)
    assert pred.shape == (B,)
    assert jnp.allclose(pred, ref, atol=1e-4, rtol=1e-4), (pred, ref)

    # p = 1 path.
    pred1 = jax.block_until_ready(n_transe_forward(e1, r, e2, p=1))
    ref1 = -jnp.sum(jnp.abs(e1 + r - e2), axis=1)
    assert jnp.allclose(pred1, ref1, atol=1e-4, rtol=1e-4), (pred1, ref1)

    # Previous decoder-style interface (gather + score) still supported.
    N, R = 16, 8
    ins_emb = jax.random.normal(k4, (N, D), dtype=jnp.float32)
    rel_emb = jax.random.normal(k5, (R, D), dtype=jnp.float32)
    sample = jnp.stack(
        [
            jax.random.randint(kh, (B,), 0, N),   # head entity index
            jax.random.randint(kr, (B,), 0, R),   # relation index
            jax.random.randint(kt, (B,), 0, N),   # tail entity index
        ],
        axis=1,
    ).astype(jnp.int32)
    pred2 = jax.block_until_ready(decoder_transe_forward(ins_emb, rel_emb, sample, p=2))
    ref2 = -jnp.linalg.norm(
        ins_emb[sample[:, 0]] + rel_emb[sample[:, 1]] - ins_emb[sample[:, 2]], axis=1
    )
    assert jnp.allclose(pred2, ref2, atol=1e-4, rtol=1e-4), (pred2, ref2)

    print("KERNEL_OK")
</pallas_src>

<mosaic_0001>
module attributes {stable_mosaic.version = 11 : i64} {
  func.func @_n_transe_kernel(%arg0: i32, %arg1: memref<128x128xf32, #tpu.memory_space<vmem>>, %arg2: memref<128x128xf32, #tpu.memory_space<vmem>>, %arg3: memref<128x128xf32, #tpu.memory_space<vmem>>, %arg4: memref<128x1xf32, #tpu.memory_space<vmem>>) attributes {dimension_semantics = [#tpu.dimension_semantics<parallel>], iteration_bounds = array<i64: 1>, scalar_prefetch = 0 : i64, scratch_operands = 0 : i64, tpu.core_type = #tpu.core_type<tc>, window_params = [{transform_indices = @transform_0, window_bounds = array<i64: 128, 128>}, {transform_indices = @transform_1, window_bounds = array<i64: 128, 128>}, {transform_indices = @transform_2, window_bounds = array<i64: 128, 128>}, {transform_indices = @transform_3, window_bounds = array<i64: 128, 1>}]} {
    %c0 = arith.constant 0 : index
    %c0_0 = arith.constant 0 : index
    %0 = vector.load %arg1[%c0, %c0_0] : memref<128x128xf32, #tpu.memory_space<vmem>>, vector<128x128xf32>
    %c0_1 = arith.constant 0 : index
    %c0_2 = arith.constant 0 : index
    %1 = vector.load %arg2[%c0_1, %c0_2] : memref<128x128xf32, #tpu.memory_space<vmem>>, vector<128x128xf32>
    %2 = arith.addf %0, %1 : vector<128x128xf32>
    %c0_3 = arith.constant 0 : index
    %c0_4 = arith.constant 0 : index
    %3 = vector.load %arg3[%c0_3, %c0_4] : memref<128x128xf32, #tpu.memory_space<vmem>>, vector<128x128xf32>
    %4 = arith.subf %2, %3 : vector<128x128xf32>
    %5 = arith.mulf %4, %4 : vector<128x128xf32>
    %cst = arith.constant dense<0.000000e+00> : vector<128xf32>
    %6 = vector.multi_reduction <add>, %5, %cst [1] : vector<128x128xf32> to vector<128xf32>
    %7 = vector.shape_cast %6 : vector<128xf32> to vector<128x1xf32>
    %8 = math.sqrt %7 : vector<128x1xf32>
    %cst_5 = arith.constant 0.000000e+00 : f32
    %9 = vector.broadcast %cst_5 : f32 to vector<128x1xf32>
    %10 = arith.subf %9, %8 : vector<128x1xf32>
    %c0_6 = arith.constant 0 : index
    %c0_7 = arith.constant 0 : index
    %11 = vector.load %arg4[%c0_6, %c0_7] : memref<128x1xf32, #tpu.memory_space<vmem>>, vector<128x1xf32>
    tpu.vector_store %arg4[%c0_6, %c0_7], %10 {strides = array<i32>} : memref<128x1xf32, #tpu.memory_space<vmem>>, vector<128x1xf32>,
    return
  }
  func.func @transform_0(%arg0: i32) -> (i32, i32) {
    %c0_i32 = arith.constant 0 : i32
    %c0_i32_0 = arith.constant 0 : i32
    return %arg0, %c0_i32 : i32, i32
  }
  func.func @transform_1(%arg0: i32) -> (i32, i32) {
    %c0_i32 = arith.constant 0 : i32
    %c0_i32_0 = arith.constant 0 : i32
    return %arg0, %c0_i32 : i32, i32
  }
  func.func @transform_2(%arg0: i32) -> (i32, i32) {
    %c0_i32 = arith.constant 0 : i32
    %c0_i32_0 = arith.constant 0 : i32
    return %arg0, %c0_i32 : i32, i32
  }
  func.func @transform_3(%arg0: i32) -> (i32, i32) {
    %c0_i32 = arith.constant 0 : i32
    %c0_i32_0 = arith.constant 0 : i32
    return %arg0, %c0_i32 : i32, i32
  }
}

</mosaic_0001>

<llo_original>
// kernel: tpu_custom_call.1
$region0: #{tpu_custom_call.1}
  #allocation0 [shape = 'u32[]', space=smem, size = 0x4, offset = 0x4, fixed_abs, tag = 'smem constant byte address 0x4 - core index']
  #allocation1 [shape = 'u32[144,128]{1,0:T(1,128)}', space=vmem, size = 0x12000, scoped, tag = 'internal scratch']
  %s0 = inlined_call_operand.hbm [shape: f32[128,128], index: 0, kind: input, shape index: {}]
  %s1 = inlined_call_operand.hbm [shape: f32[128,128], index: 1, kind: input, shape index: {}]
  %s2 = inlined_call_operand.hbm [shape: f32[128,128], index: 2, kind: input, shape index: {}]
  %s3 = inlined_call_operand.vmem [shape: f32[128,1], index: 3, kind: output, shape index: {}]
  %s4 = sld [smem:[#allocation0]]
  $region34: #{tpu_custom_call.1} parent=0
    _
  %s6 = ssub.s32 1, %s4
  %s7 = scalar_select 0, %s6, %s4
  $region1: #{tpu_custom_call.1} parent=0
    #allocation2 [shape = 'u8[65536]{0}', space=vmem, size = 0x10000, scoped, tag = 'input window, operand 0, single buffered']
    #allocation3 [shape = 's32[1]{0}', space=sflag, size = 0x4, scoped, tag = 'scoped memory for tpu_custom_call.1']
    #allocation4 [shape = 'u8[65536]{0}', space=vmem, size = 0x10000, scoped, tag = 'input window, operand 1, single buffered']
    #allocation5 [shape = 's32[1]{0}', space=sflag, size = 0x4, scoped, tag = 'scoped memory for tpu_custom_call.1']
    #allocation6 [shape = 'u8[65536]{0}', space=vmem, size = 0x10000, scoped, tag = 'input window, operand 2, single buffered']
    %8 = vsyncpa [#allocation3], 0
    %9 = vsyncpa [#allocation5], 0
    // Predicated region
    $region2: #{tpu_custom_call.1} parent=1 // pred_check
      _
    $region3: #{tpu_custom_call.1} parent=1 // pred_check_branch
      %11 = sbr.rel (0) target = $region5
    $region4: #{tpu_custom_call.1} parent=1 // pred_region
      %s13 = ssub.s32 2048, 2048
      %14 = vsyncadd [#allocation3], %s13
      %s15 = sshll.u32 [#allocation2], 4
      %s16 = int_to_ptr.vmem [resolvable:$true] %s15
      %21 = dma.hbm_to_vmem [thread:$0]  %s0, 2048, %s16, [#allocation3], 128, 128, 8
    $region5: #{tpu_custom_call.1} parent=1 // pred_fallthru
      _
    // Predicated region
    $region6: #{tpu_custom_call.1} parent=1 // pred_check
      _
    $region7: #{tpu_custom_call.1} parent=1 // pred_check_branch
      %23 = sbr.rel (0) target = $region9
    $region8: #{tpu_custom_call.1} parent=1 // pred_region
      %s25 = ssub.s32 2048, 2048
      %26 = vsyncadd [#allocation5], %s25
      %s27 = sshll.u32 [#allocation4], 4
      %s28 = int_to_ptr.vmem [resolvable:$true] %s27
      %33 = dma.hbm_to_vmem [thread:$0]  %s1, 2048, %s28, [#allocation5], 128, 128, 8
    $region9: #{tpu_custom_call.1} parent=1 // pred_fallthru
      _
    // Predicated region
    $region10: #{tpu_custom_call.1} parent=1 // pred_check
      _
    $region11: #{tpu_custom_call.1} parent=1 // pred_check_branch
      %35 = sbr.rel (0) target = $region13
    $region12: #{tpu_custom_call.1} parent=1 // pred_region
      %s37 = ssub.s32 2048, 2048
      %38 = vsyncadd [#allocation5], %s37
      %s39 = sshll.u32 [#allocation6], 4
      %s40 = int_to_ptr.vmem [resolvable:$true] %s39
      %45 = dma.hbm_to_vmem [thread:$0]  %s2, 2048, %s40, [#allocation5], 128, 128, 8
    $region13: #{tpu_custom_call.1} parent=1 // pred_fallthru
      _
    // Predicated region
    $region14: #{tpu_custom_call.1} parent=1 // pred_check
      _
    $region15: #{tpu_custom_call.1} parent=1 // pred_check_branch
      %47 = sbr.rel (0) target = $region17
    $region16: #{tpu_custom_call.1} parent=1 // pred_region
      %48 = dma.done [#allocation3], 2048
    $region17: #{tpu_custom_call.1} parent=1 // pred_fallthru
      _
    // Predicated region
    $region18: #{tpu_custom_call.1} parent=1 // pred_check
      _
    $region19: #{tpu_custom_call.1} parent=1 // pred_check_branch
      %50 = sbr.rel (0) target = $region21
    $region20: #{tpu_custom_call.1} parent=1 // pred_region
      %51 = dma.done [#allocation5], 2048
    $region21: #{tpu_custom_call.1} parent=1 // pred_fallthru
      _
    // Predicated region
    $region22: #{tpu_custom_call.1} parent=1 // pred_check
      _
    $region23: #{tpu_custom_call.1} parent=1 // pred_check_branch
      %53 = sbr.rel (0) target = $region25
    $region24: #{tpu_custom_call.1} parent=1 // pred_region
      %54 = dma.done [#allocation5], 2048
    $region25: #{tpu_custom_call.1} parent=1 // pred_fallthru
      _
    %v55 = vld [vmem:[#allocation2] sm:$0xff]
    %v56 = vld [vmem:[#allocation2 + $0x8] sm:$0xff]
    %v57 = vld [vmem:[#allocation2 + $0x10] sm:$0xff]
    %v58 = vld [vmem:[#allocation2 + $0x18] sm:$0xff]
    %v59 = vld [vmem:[#allocation2 + $0x20] sm:$0xff]
    %v60 = vld [vmem:[#allocation2 + $0x28] sm:$0xff]
    %v61 = vld [vmem:[#allocation2 + $0x30] sm:$0xff]
    %v62 = vld [vmem:[#allocation2 + $0x38] sm:$0xff]
    %v63 = vld [vmem:[#allocation2 + $0x40] sm:$0xff]
    %v64 = vld [vmem:[#allocation2 + $0x48] sm:$0xff]
    %v65 = vld [vmem:[#allocation2 + $0x50] sm:$0xff]
    %v66 = vld [vmem:[#allocation2 + $0x58] sm:$0xff]
    %v67 = vld [vmem:[#allocation2 + $0x60] sm:$0xff]
    %v68 = vld [vmem:[#allocation2 + $0x68] sm:$0xff]
    %v69 = vld [vmem:[#allocation2 + $0x70] sm:$0xff]
    %v70 = vld [vmem:[#allocation2 + $0x78] sm:$0xff]
    %v71 = vld [vmem:[#allocation4] sm:$0xff]
    %v72 = vld [vmem:[#allocation4 + $0x8] sm:$0xff]
    %v73 = vld [vmem:[#allocation4 + $0x10] sm:$0xff]
    %v74 = vld [vmem:[#allocation4 + $0x18] sm:$0xff]
    %v75 = vld [vmem:[#allocation4 + $0x20] sm:$0xff]
    %v76 = vld [vmem:[#allocation4 + $0x28] sm:$0xff]
    %v77 = vld [vmem:[#allocation4 + $0x30] sm:$0xff]
    %v78 = vld [vmem:[#allocation4 + $0x38] sm:$0xff]
    %v79 = vld [vmem:[#allocation4 + $0x40] sm:$0xff]
    %v80 = vld [vmem:[#allocation4 + $0x48] sm:$0xff]
    %v81 = vld [vmem:[#allocation4 + $0x50] sm:$0xff]
    %v82 = vld [vmem:[#allocation4 + $0x58] sm:$0xff]
    %v83 = vld [vmem:[#allocation4 + $0x60] sm:$0xff]
    %v84 = vld [vmem:[#allocation4 + $0x68] sm:$0xff]
    %v85 = vld [vmem:[#allocation4 + $0x70] sm:$0xff]
    %v86 = vld [vmem:[#allocation4 + $0x78] sm:$0xff]
    %v87 = vadd.f32 %v55, %v71
    %v88 = vadd.f32 %v56, %v72
    %v89 = vadd.f32 %v57, %v73
    %v90 = vadd.f32 %v58, %v74
    %v91 = vadd.f32 %v59, %v75
    %v92 = vadd.f32 %v60, %v76
    %v93 = vadd.f32 %v61, %v77
    %v94 = vadd.f32 %v62, %v78
    %v95 = vadd.f32 %v63, %v79
    %v96 = vadd.f32 %v64, %v80
    %v97 = vadd.f32 %v65, %v81
    %v98 = vadd.f32 %v66, %v82
    %v99 = vadd.f32 %v67, %v83
    %v100 = vadd.f32 %v68, %v84
    %v101 = vadd.f32 %v69, %v85
    %v102 = vadd.f32 %v70, %v86
    %v103 = vld [vmem:[#allocation6] sm:$0xff]
    %v104 = vld [vmem:[#allocation6 + $0x8] sm:$0xff]
    %v105 = vld [vmem:[#allocation6 + $0x10] sm:$0xff]
    %v106 = vld [vmem:[#allocation6 + $0x18] sm:$0xff]
    %v107 = vld [vmem:[#allocation6 + $0x20] sm:$0xff]
    %v108 = vld [vmem:[#allocation6 + $0x28] sm:$0xff]
    %v109 = vld [vmem:[#allocation6 + $0x30] sm:$0xff]
    %v110 = vld [vmem:[#allocation6 + $0x38] sm:$0xff]
    %v111 = vld [vmem:[#allocation6 + $0x40] sm:$0xff]
    %v112 = vld [vmem:[#allocation6 + $0x48] sm:$0xff]
    %v113 = vld [vmem:[#allocation6 + $0x50] sm:$0xff]
    %v114 = vld [vmem:[#allocation6 + $0x58] sm:$0xff]
    %v115 = vld [vmem:[#allocation6 + $0x60] sm:$0xff]
    %v116 = vld [vmem:[#allocation6 + $0x68] sm:$0xff]
    %v117 = vld [vmem:[#allocation6 + $0x70] sm:$0xff]
    %v118 = vld [vmem:[#allocation6 + $0x78] sm:$0xff]
    %v119 = vsub.f32 %v87, %v103
    %v120 = vsub.f32 %v88, %v104
    %v121 = vsub.f32 %v89, %v105
    %v122 = vsub.f32 %v90, %v106
    %v123 = vsub.f32 %v91, %v107
    %v124 = vsub.f32 %v92, %v108
    %v125 = vsub.f32 %v93, %v109
    %v126 = vsub.f32 %v94, %v110
    %v127 = vsub.f32 %v95, %v111
    %v128 = vsub.f32 %v96, %v112
    %v129 = vsub.f32 %v97, %v113
    %v130 = vsub.f32 %v98, %v114
    %v131 = vsub.f32 %v99, %v115
    %v132 = vsub.f32 %v100, %v116
    %v133 = vsub.f32 %v101, %v117
    %v134 = vsub.f32 %v102, %v118
    %v135 = vmul.f32 %v119, %v119
    %v136 = vmul.f32 %v120, %v120
    %v137 = vmul.f32 %v121, %v121
    %v138 = vmul.f32 %v122, %v122
    %v139 = vmul.f32 %v123, %v123
    %v140 = vmul.f32 %v124, %v124
    %v141 = vmul.f32 %v125, %v125
    %v142 = vmul.f32 %v126, %v126
    %v143 = vmul.f32 %v127, %v127
    %v144 = vmul.f32 %v128, %v128
    %v145 = vmul.f32 %v129, %v129
    %v146 = vmul.f32 %v130, %v130
    %v147 = vmul.f32 %v131, %v131
    %v148 = vmul.f32 %v132, %v132
    %v149 = vmul.f32 %v133, %v133
    %v150 = vmul.f32 %v134, %v134
    %151 = vadd.xlane.f32.xlu0 %v135
    %v152 = vpop.xlane.xlu0 %151
    %153 = vadd.xlane.f32.xlu0 %v136
    %v154 = vpop.xlane.xlu0 %153
    %155 = vadd.xlane.f32.xlu0 %v137
    %v156 = vpop.xlane.xlu0 %155
    %157 = vadd.xlane.f32.xlu0 %v138
    %v158 = vpop.xlane.xlu0 %157
    %159 = vadd.xlane.f32.xlu0 %v139
    %v160 = vpop.xlane.xlu0 %159
    %161 = vadd.xlane.f32.xlu0 %v140
    %v162 = vpop.xlane.xlu0 %161
    %163 = vadd.xlane.f32.xlu0 %v141
    %v164 = vpop.xlane.xlu0 %163
    %165 = vadd.xlane.f32.xlu0 %v142
    %v166 = vpop.xlane.xlu0 %165
    %167 = vadd.xlane.f32.xlu0 %v143
    %v168 = vpop.xlane.xlu0 %167
    %169 = vadd.xlane.f32.xlu0 %v144
    %v170 = vpop.xlane.xlu0 %169
    %171 = vadd.xlane.f32.xlu0 %v145
    %v172 = vpop.xlane.xlu0 %171
    %173 = vadd.xlane.f32.xlu0 %v146
    %v174 = vpop.xlane.xlu0 %173
    %175 = vadd.xlane.f32.xlu0 %v147
    %v176 = vpop.xlane.xlu0 %175
    %177 = vadd.xlane.f32.xlu0 %v148
    %v178 = vpop.xlane.xlu0 %177
    %179 = vadd.xlane.f32.xlu0 %v149
    %v180 = vpop.xlane.xlu0 %179
    %181 = vadd.xlane.f32.xlu0 %v150
    %v182 = vpop.xlane.xlu0 %181
    %v183 = vrsqrt.pop %v152
    %v184 = vmul.f32 %v152, %v183
    %vm185 = vcmp.eq.f32.partialorder %v152, inf
    %v186 = vsel %vm185, %v152, %v184
    %vm187 = vcmp.eq.f32.partialorder %v152, 0.0
    %v188 = vand.u32 %v152, 2147483648
    %v189 = vsel %vm187, %v188, %v186
    %v190 = vrsqrt.pop %v154
    %v191 = vmul.f32 %v154, %v190
    %vm192 = vcmp.eq.f32.partialorder %v154, inf
    %v193 = vsel %vm192, %v154, %v191
    %vm194 = vcmp.eq.f32.partialorder %v154, 0.0
    %v195 = vand.u32 %v154, 2147483648
    %v196 = vsel %vm194, %v195, %v193
    %v197 = vrsqrt.pop %v156
    %v198 = vmul.f32 %v156, %v197
    %vm199 = vcmp.eq.f32.partialorder %v156, inf
    %v200 = vsel %vm199, %v156, %v198
    %vm201 = vcmp.eq.f32.partialorder %v156, 0.0
    %v202 = vand.u32 %v156, 2147483648
    %v203 = vsel %vm201, %v202, %v200
    %v204 = vrsqrt.pop %v158
    %v205 = vmul.f32 %v158, %v204
    %vm206 = vcmp.eq.f32.partialorder %v158, inf
    %v207 = vsel %vm206, %v158, %v205
    %vm208 = vcmp.eq.f32.partialorder %v158, 0.0
    %v209 = vand.u32 %v158, 2147483648
    %v210 = vsel %vm208, %v209, %v207
    %v211 = vrsqrt.pop %v160
    %v212 = vmul.f32 %v160, %v211
    %vm213 = vcmp.eq.f32.partialorder %v160, inf
    %v214 = vsel %vm213, %v160, %v212
    %vm215 = vcmp.eq.f32.partialorder %v160, 0.0
    %v216 = vand.u32 %v160, 2147483648
    %v217 = vsel %vm215, %v216, %v214
    %v218 = vrsqrt.pop %v162
    %v219 = vmul.f32 %v162, %v218
    %vm220 = vcmp.eq.f32.partialorder %v162, inf
    %v221 = vsel %vm220, %v162, %v219
    %vm222 = vcmp.eq.f32.partialorder %v162, 0.0
    %v223 = vand.u32 %v162, 2147483648
    %v224 = vsel %vm222, %v223, %v221
    %v225 = vrsqrt.pop %v164
    %v226 = vmul.f32 %v164, %v225
    %vm227 = vcmp.eq.f32.partialorder %v164, inf
    %v228 = vsel %vm227, %v164, %v226
    %vm229 = vcmp.eq.f32.partialorder %v164, 0.0
    %v230 = vand.u32 %v164, 2147483648
    %v231 = vsel %vm229, %v230, %v228
    %v232 = vrsqrt.pop %v166
    %v233 = vmul.f32 %v166, %v232
    %vm234 = vcmp.eq.f32.partialorder %v166, inf
    %v235 = vsel %vm234, %v166, %v233
    %vm236 = vcmp.eq.f32.partialorder %v166, 0.0
    %v237 = vand.u32 %v166, 2147483648
    %v238 = vsel %vm236, %v237, %v235
    %v239 = vrsqrt.pop %v168
    %v240 = vmul.f32 %v168, %v239
    %vm241 = vcmp.eq.f32.partialorder %v168, inf
    %v242 = vsel %vm241, %v168, %v240
    %vm243 = vcmp.eq.f32.partialorder %v168, 0.0
    %v244 = vand.u32 %v168, 2147483648
    %v245 = vsel %vm243, %v244, %v242
    %v246 = vrsqrt.pop %v170
    %v247 = vmul.f32 %v170, %v246
    %vm248 = vcmp.eq.f32.partialorder %v170, inf
    %v249 = vsel %vm248, %v170, %v247
    %vm250 = vcmp.eq.f32.partialorder %v170, 0.0
    %v251 = vand.u32 %v170, 2147483648
    %v252 = vsel %vm250, %v251, %v249
    %v253 = vrsqrt.pop %v172
    %v254 = vmul.f32 %v172, %v253
    %vm255 = vcmp.eq.f32.partialorder %v172, inf
    %v256 = vsel %vm255, %v172, %v254
    %vm257 = vcmp.eq.f32.partialorder %v172, 0.0
    %v258 = vand.u32 %v172, 2147483648
    %v259 = vsel %vm257, %v258, %v256
    %v260 = vrsqrt.pop %v174
    %v261 = vmul.f32 %v174, %v260
    %vm262 = vcmp.eq.f32.partialorder %v174, inf
    %v263 = vsel %vm262, %v174, %v261
    %vm264 = vcmp.eq.f32.partialorder %v174, 0.0
    %v265 = vand.u32 %v174, 2147483648
    %v266 = vsel %vm264, %v265, %v263
    %v267 = vrsqrt.pop %v176
    %v268 = vmul.f32 %v176, %v267
    %vm269 = vcmp.eq.f32.partialorder %v176, inf
    %v270 = vsel %vm269, %v176, %v268
    %vm271 = vcmp.eq.f32.partialorder %v176, 0.0
    %v272 = vand.u32 %v176, 2147483648
    %v273 = vsel %vm271, %v272, %v270
    %v274 = vrsqrt.pop %v178
    %v275 = vmul.f32 %v178, %v274
    %vm276 = vcmp.eq.f32.partialorder %v178, inf
    %v277 = vsel %vm276, %v178, %v275
    %vm278 = vcmp.eq.f32.partialorder %v178, 0.0
    %v279 = vand.u32 %v178, 2147483648
    %v280 = vsel %vm278, %v279, %v277
    %v281 = vrsqrt.pop %v180
    %v282 = vmul.f32 %v180, %v281
    %vm283 = vcmp.eq.f32.partialorder %v180, inf
    %v284 = vsel %vm283, %v180, %v282
    %vm285 = vcmp.eq.f32.partialorder %v180, 0.0
    %v286 = vand.u32 %v180, 2147483648
    %v287 = vsel %vm285, %v286, %v284
    %v288 = vrsqrt.pop %v182
    %v289 = vmul.f32 %v182, %v288
    %vm290 = vcmp.eq.f32.partialorder %v182, inf
    %v291 = vsel %vm290, %v182, %v289
    %vm292 = vcmp.eq.f32.partialorder %v182, 0.0
    %v293 = vand.u32 %v182, 2147483648
    %v294 = vsel %vm292, %v293, %v291
    %v295 = vsub.f32 0.0, %v189
    %v296 = vsub.f32 0.0, %v196
    %v297 = vsub.f32 0.0, %v203
    %v298 = vsub.f32 0.0, %v210
    %v299 = vsub.f32 0.0, %v217
    %v300 = vsub.f32 0.0, %v224
    %v301 = vsub.f32 0.0, %v231
    %v302 = vsub.f32 0.0, %v238
    %v303 = vsub.f32 0.0, %v245
    %v304 = vsub.f32 0.0, %v252
    %v305 = vsub.f32 0.0, %v259
    %v306 = vsub.f32 0.0, %v266
    %v307 = vsub.f32 0.0, %v273
    %v308 = vsub.f32 0.0, %v280
    %v309 = vsub.f32 0.0, %v287
    %v310 = vsub.f32 0.0, %v294
    %vm311 = vcmask 7168
    %312 = vst.msk [vmem:[%s3] sm:$0xff] %vm311, %v295
    %313 = vst.msk [vmem:[%s3 + $0x8] sm:$0xff] %vm311, %v296
    %314 = vst.msk [vmem:[%s3 + $0x10] sm:$0xff] %vm311, %v297
    %315 = vst.msk [vmem:[%s3 + $0x18] sm:$0xff] %vm311, %v298
    %316 = vst.msk [vmem:[%s3 + $0x20] sm:$0xff] %vm311, %v299
    %317 = vst.msk [vmem:[%s3 + $0x28] sm:$0xff] %vm311, %v300
    %318 = vst.msk [vmem:[%s3 + $0x30] sm:$0xff] %vm311, %v301
    %319 = vst.msk [vmem:[%s3 + $0x38] sm:$0xff] %vm311, %v302
    %320 = vst.msk [vmem:[%s3 + $0x40] sm:$0xff] %vm311, %v303
    %321 = vst.msk [vmem:[%s3 + $0x48] sm:$0xff] %vm311, %v304
    %322 = vst.msk [vmem:[%s3 + $0x50] sm:$0xff] %vm311, %v305
    %323 = vst.msk [vmem:[%s3 + $0x58] sm:$0xff] %vm311, %v306
    %324 = vst.msk [vmem:[%s3 + $0x60] sm:$0xff] %vm311, %v307
    %325 = vst.msk [vmem:[%s3 + $0x68] sm:$0xff] %vm311, %v308
    %326 = vst.msk [vmem:[%s3 + $0x70] sm:$0xff] %vm311, %v309
    %327 = vst.msk [vmem:[%s3 + $0x78] sm:$0xff] %vm311, %v310
    // Predicated region
    $region26: #{tpu_custom_call.1} parent=1 // pred_check
      _
    $region27: #{tpu_custom_call.1} parent=1 // pred_check_branch
      %329 = sbr.rel (0) target = $region29
    $region28: #{tpu_custom_call.1} parent=1 // pred_region
      _
    $region29: #{tpu_custom_call.1} parent=1 // pred_fallthru
      _
    // Predicated region
    $region30: #{tpu_custom_call.1} parent=1 // pred_check
      _
    $region31: #{tpu_custom_call.1} parent=1 // pred_check_branch
      %331 = sbr.rel (0) target = $region33
    $region32: #{tpu_custom_call.1} parent=1 // pred_region
      _
    $region33: #{tpu_custom_call.1} parent=1 // pred_fallthru
      _
    %332 = vsyncpa [#allocation3], 1
    %333 = vsyncpa [#allocation5], 1

</llo_original>
